<compile_context>
chip_gen: v7x
topology: tpu7x:2x2x1
jax: 0.10.0
libtpu: 0.0.40
codegen_flags: <defaults>
</compile_context>

<pallas_src>
import math

import jax
import jax.numpy as jnp
from jax.experimental import pallas as pl
from jax.experimental.pallas import tpu as pltpu

_LANE = 128
_SUBLANE = 8

# Below this element count the Pallas launch overhead dwarfs the add; use the
# plain jnp broadcast add (which XLA can fuse into the producer op).
_DEFAULT_MIN_PALLAS_ELEMENTS = 64 * 1024

# Target bytes for ONE tile (x or out).  Per grid step we hold x + out tiles,
# each double-buffered -> ~4x this resident in VMEM (~16 MiB), well under the
# 32 MiB scoped limit and the 64 MiB physical VMEM of a v7x TensorCore.
_TARGET_TILE_BYTES = 4 * 1024 * 1024
_VMEM_LIMIT_BYTES = 32 * 1024 * 1024
# Keep at least this many row-grid steps on large inputs so output writeback of
# tile i-1 overlaps the read of tile i+1 and v7x's 2 TCs both get work.
_MIN_GRID_M = 8


def _add_bias_kernel(x_ref, b_ref, o_ref):
    # (tile_m, tile_c) + (1, tile_c) row-broadcast add on the VPU.
    # Cast (if any) happens in VMEM -> no extra HBM pass for dtype promotion.
    o_ref[...] = x_ref[...].astype(o_ref.dtype) + b_ref[...]


def _sublane_multiple(*dtypes):
    # Sub-32-bit dtypes pack rows along sublanes: f32 -> 8, bf16 -> 16, i8 -> 32.
    itemsize = min(jnp.dtype(d).itemsize for d in dtypes)
    return max(_SUBLANE, 32 // max(1, itemsize))


def _pick_tiles(M, C, x_dtype, out_dtype):
    x_item = jnp.dtype(x_dtype).itemsize
    o_item = jnp.dtype(out_dtype).itemsize
    per_elem = x_item + o_item              # x tile + out tile, bytes per element
    sub = _sublane_multiple(x_dtype, out_dtype)
    budget = 2 * _TARGET_TILE_BYTES         # combined (x + out) per-step budget

    # Column tile: full C unless even a minimal-row tile over full C would blow
    # the budget; then tile C in lane (128) multiples.
    if C * sub * per_elem <= budget:
        tile_c = C
    else:
        tile_c = (budget // (sub * per_elem)) // _LANE * _LANE
        tile_c = max(_LANE, min(tile_c, C))
        if tile_c >= C:
            tile_c = C

    # Row tile: as big as the budget allows, but keep >= _MIN_GRID_M grid steps
    # for large arrays (pipelining + v7x dual-TC sharding).
    bytes_per_row = max(1, tile_c * per_elem)
    rows = budget // bytes_per_row
    rows = min(rows, max(sub, pl.cdiv(M, _MIN_GRID_M)))
    rows = max(sub, (rows // sub) * sub)
    tile_m = min(rows, M)                   # full-extent block when M is small
    return tile_m, tile_c


def _add_bias_2d_pallas(x2d, bias_row, out_dtype):
    """x2d: (M, C), bias_row: (1, C) in out_dtype -> (M, C) out_dtype."""
    M, C = x2d.shape
    tile_m, tile_c = _pick_tiles(M, C, x2d.dtype, out_dtype)
    grid = (pl.cdiv(M, tile_m), pl.cdiv(C, tile_c))
    x_item = x2d.dtype.itemsize
    o_item = jnp.dtype(out_dtype).itemsize
    cost = pl.CostEstimate(
        flops=M * C,
        transcendentals=0,
        bytes_accessed=M * C * (x_item + o_item) + C * o_item,
    )
    return pl.pallas_call(
        _add_bias_kernel,
        out_shape=jax.ShapeDtypeStruct((M, C), out_dtype),
        grid_spec=pltpu.PrefetchScalarGridSpec(
            num_scalar_prefetch=0,
            grid=grid,
            in_specs=[
                pl.BlockSpec((tile_m, tile_c), lambda i, j: (i, j)),
                pl.BlockSpec((1, tile_c), lambda i, j: (0, j)),  # bias resident
            ],
            out_specs=pl.BlockSpec((tile_m, tile_c), lambda i, j: (i, j)),
        ),
        compiler_params=pltpu.CompilerParams(
            dimension_semantics=("parallel", "parallel"),
            vmem_limit_bytes=_VMEM_LIMIT_BYTES,
        ),
        cost_estimate=cost,
    )(x2d, bias_row)


def _add_bias_2d(x2d, bias_row, bias_packed, out_dtype):
    """Dispatch with lane-dense repacking for narrow feature dims (C < 128)."""
    M, C = x2d.shape
    if C < _LANE and M > 0:
        packed_c = bias_packed.shape[1]       # lcm(C, 128)
        rep = packed_c // C
        body_rows = (M // rep) * rep
        if body_rows == M and body_rows > 0:
            # Pure layout plumbing: (M, C) row-major -> (M/rep, lcm(C,128)).
            out = _add_bias_2d_pallas(
                x2d.reshape(M // rep, packed_c), bias_packed, out_dtype)
            return out.reshape(M, C)
        if body_rows >= rep * _MIN_GRID_M:
            # Large body goes lane-dense; the < rep-row tail is a tiny jnp add.
            body = _add_bias_2d_pallas(
                x2d[:body_rows].reshape(body_rows // rep, packed_c),
                bias_packed, out_dtype).reshape(body_rows, C)
            tail = x2d[body_rows:].astype(out_dtype) + bias_row
            return jnp.concatenate([body, tail], axis=0)
    return _add_bias_2d_pallas(x2d, bias_row, out_dtype)


class AddBias:
    """JAX/Pallas port of the PyTorch AddBias module."""

    def __init__(self, bias, min_pallas_elements=_DEFAULT_MIN_PALLAS_ELEMENTS):
        # Mirror nn.Parameter(bias.unsqueeze(1)): stored as (C, 1).
        self._bias = jnp.asarray(bias).reshape(-1, 1)
        self._min_pallas_elements = min_pallas_elements
        self._bias_cache = {}  # dtype name -> (bias_row (1,C), bias_packed)

    def _bias_rows(self, out_dtype):
        key = jnp.dtype(out_dtype).name
        cached = self._bias_cache.get(key)
        if cached is None:
            C = self._bias.shape[0]
            bias_row = self._bias.T.reshape(1, -1).astype(out_dtype)
            if C < _LANE:
                rep = math.lcm(C, _LANE) // C
                bias_packed = jnp.tile(bias_row, (1, rep))
            else:
                bias_packed = bias_row
            cached = (bias_row, bias_packed)
            self._bias_cache[key] = cached
        return cached

    def __call__(self, x):
        x = jnp.asarray(x)
        C = self._bias.shape[0]
        # PyTorch type promotion: x + bias computes/returns the promoted dtype.
        out_dtype = jnp.promote_types(x.dtype, self._bias.dtype)
        bias_row, bias_packed = self._bias_rows(out_dtype)

        if x.ndim == 1:
            # PyTorch: (C,) + (1, C) broadcasts to (1, C).
            x2d = x.reshape(1, C)
            out_shape = (1, C)
        elif x.ndim == 2:
            x2d = x
            out_shape = x.shape
        elif x.ndim == 3:
            B, T, _ = x.shape
            x2d = x.reshape(B * T, C)
            out_shape = (B, T, C)
        else:
            raise AssertionError("AddBias: unsupported input rank")

        if x2d.size < self._min_pallas_elements:
            # Tiny add: skip the custom call so XLA can fuse it.
            out = x2d.astype(out_dtype) + bias_row
        else:
            out = _add_bias_2d(x2d, bias_row, bias_packed, out_dtype)
        return out.reshape(out_shape)


if __name__ == "__main__":
    key = jax.random.PRNGKey(0)
    k_bias, k_x1, k_x2, k_x3 = jax.random.split(key, 4)

    hidden = 32
    batch = 2
    seq = 8

    # Deterministic parameter init (synthetic; no checkpoint load).
    bias = jax.random.normal(k_bias, (hidden,), dtype=jnp.float32)

    # Force the Pallas path even at these small harness shapes.
    module = AddBias(bias, min_pallas_elements=0)
    # Default module exercises the tiny-shape fallback path.
    module_fallback = AddBias(bias)

    # 2D input: (batch, hidden)
    x2 = jax.random.normal(k_x2, (batch, hidden), dtype=jnp.float32)
    ref2 = x2 + bias.reshape(1, -1)
    y2 = jax.block_until_ready(module(x2))
    assert y2.shape == (batch, hidden)
    assert jnp.allclose(y2, ref2, atol=1e-6)
    assert jnp.allclose(module_fallback(x2), ref2, atol=1e-6)

    # 1D input: (hidden,) -> broadcasts to (1, hidden) like torch.
    x1 = jax.random.normal(k_x1, (hidden,), dtype=jnp.float32)
    ref1 = x1.reshape(1, -1) + bias.reshape(1, -1)
    y1 = jax.block_until_ready(module(x1))
    assert y1.shape == (1, hidden)
    assert jnp.allclose(y1, ref1, atol=1e-6)

    # 3D input: (batch, seq, hidden) -> hits the lane-dense repacked path.
    x3 = jax.random.normal(k_x3, (batch, seq, hidden), dtype=jnp.float32)
    ref3 = x3 + bias.reshape(1, 1, -1)
    y3 = jax.block_until_ready(module(x3))
    assert y3.shape == (batch, seq, hidden)
    assert jnp.allclose(y3, ref3, atol=1e-6)
    assert jnp.allclose(module_fallback(x3), ref3, atol=1e-6)

    print("KERNEL_OK")
</pallas_src>

<mosaic_0001>
module attributes {stable_mosaic.version = 11 : i64} {
  func.func @_add_bias_kernel(%arg0: i32, %arg1: i32, %arg2: memref<2x32xf32, #tpu.memory_space<vmem>>, %arg3: memref<1x32xf32, #tpu.memory_space<vmem>>, %arg4: memref<2x32xf32, #tpu.memory_space<vmem>>) attributes {dimension_semantics = [#tpu.dimension_semantics<parallel>, #tpu.dimension_semantics<parallel>], iteration_bounds = array<i64: 1, 1>, scalar_prefetch = 0 : i64, scratch_operands = 0 : i64, tpu.core_type = #tpu.core_type<tc>, window_params = [{transform_indices = @transform_0, window_bounds = array<i64: 2, 32>}, {transform_indices = @transform_1, window_bounds = array<i64: 1, 32>}, {transform_indices = @transform_2, window_bounds = array<i64: 2, 32>}]} {
    %c0 = arith.constant 0 : index
    %c0_0 = arith.constant 0 : index
    %0 = vector.load %arg2[%c0, %c0_0] : memref<2x32xf32, #tpu.memory_space<vmem>>, vector<2x32xf32>
    %c0_1 = arith.constant 0 : index
    %c0_2 = arith.constant 0 : index
    %1 = vector.load %arg3[%c0_1, %c0_2] : memref<1x32xf32, #tpu.memory_space<vmem>>, vector<1x32xf32>
    %2 = vector.broadcast %1 : vector<1x32xf32> to vector<2x32xf32>
    %3 = arith.addf %0, %2 : vector<2x32xf32>
    %c0_3 = arith.constant 0 : index
    %c0_4 = arith.constant 0 : index
    %4 = vector.load %arg4[%c0_3, %c0_4] : memref<2x32xf32, #tpu.memory_space<vmem>>, vector<2x32xf32>
    tpu.vector_store %arg4[%c0_3, %c0_4], %3 {strides = array<i32>} : memref<2x32xf32, #tpu.memory_space<vmem>>, vector<2x32xf32>,
    return
  }
  func.func @transform_0(%arg0: i32, %arg1: i32) -> (i32, i32) {
    %c0_i32 = arith.constant 0 : i32
    return %arg0, %arg1 : i32, i32
  }
  func.func @transform_1(%arg0: i32, %arg1: i32) -> (i32, i32) {
    %c0_i32 = arith.constant 0 : i32
    %c0_i32_0 = arith.constant 0 : i32
    return %c0_i32, %arg1 : i32, i32
  }
  func.func @transform_2(%arg0: i32, %arg1: i32) -> (i32, i32) {
    %c0_i32 = arith.constant 0 : i32
    return %arg0, %arg1 : i32, i32
  }
}

</mosaic_0001>

<llo_original>
// kernel: tpu_custom_call.1
$region0: #{tpu_custom_call.1}
  #allocation0 [shape = 'u32[]', space=smem, size = 0x4, offset = 0x4, fixed_abs, tag = 'smem constant byte address 0x4 - core index']
  #allocation1 [shape = 'u32[144,128]{1,0:T(1,128)}', space=vmem, size = 0x12000, scoped, tag = 'internal scratch']
  %s0 = inlined_call_operand.hbm [shape: f32[2,32], index: 0, kind: input, shape index: {}]
  %s1 = inlined_call_operand.vmem [shape: f32[1,32], index: 1, kind: input, shape index: {}]
  %s2 = inlined_call_operand.hbm [shape: f32[2,32], index: 2, kind: output, shape index: {}]
  %s3 = sld [smem:[#allocation0]]
  $region22: #{tpu_custom_call.1} parent=0
    _
  %s5 = ssub.s32 1, %s3
  %s6 = scalar_select 0, %s5, %s3
  $region1: #{tpu_custom_call.1} parent=0
    #allocation2 [shape = 'u8[1024]{0}', space=vmem, size = 0x400, scoped, tag = 'input window, operand 0, single buffered']
    #allocation3 [shape = 's32[1]{0}', space=sflag, size = 0x4, scoped, tag = 'scoped memory for tpu_custom_call.1']
    #allocation4 [shape = 's32[1]{0}', space=sflag, size = 0x4, scoped, tag = 'scoped memory for tpu_custom_call.1']
    #allocation5 [shape = 'u8[1024]{0}', space=vmem, size = 0x400, scoped, tag = 'output window, operand 0, single buffered']
    %7 = vsyncpa [#allocation3], 0
    %8 = vsyncpa [#allocation4], 0
    // Predicated region
    $region2: #{tpu_custom_call.1} parent=1 // pred_check
      _
    $region3: #{tpu_custom_call.1} parent=1 // pred_check_branch
      %10 = sbr.rel (0) target = $region5
    $region4: #{tpu_custom_call.1} parent=1 // pred_region
      %s12 = ssub.s32 32, 32
      %13 = vsyncadd [#allocation3], %s12
      %s15 = sshll.u32 [#allocation2], 4
      %s16 = int_to_ptr.vmem [resolvable:$true] %s15
      %18 = dma.hbm_to_vmem [thread:$0]  %s0, 32, %s16, [#allocation3]
    $region5: #{tpu_custom_call.1} parent=1 // pred_fallthru
      _
    // Predicated region
    $region6: #{tpu_custom_call.1} parent=1 // pred_check
      _
    $region7: #{tpu_custom_call.1} parent=1 // pred_check_branch
      %20 = sbr.rel (0) target = $region9
    $region8: #{tpu_custom_call.1} parent=1 // pred_region
      _
    $region9: #{tpu_custom_call.1} parent=1 // pred_fallthru
      _
    // Predicated region
    $region10: #{tpu_custom_call.1} parent=1 // pred_check
      _
    $region11: #{tpu_custom_call.1} parent=1 // pred_check_branch
      %22 = sbr.rel (0) target = $region13
    $region12: #{tpu_custom_call.1} parent=1 // pred_region
      %23 = dma.done [#allocation3], 32
    $region13: #{tpu_custom_call.1} parent=1 // pred_fallthru
      _
    %v24 = vld [vmem:[#allocation2] sm:$0x3]
    %v25 = vld [vmem:[%s1] sm:$0x1]
    %v27 = vlaneseq
    %v28 = vshrl.u32 %v27, 7
    %v29 = vsub.s32 0, %v28
    %v30 = vrot.slane %v25, %v29
    %v32 = vadd.f32 %v24, %v30
    %vm33 = vcmask 254976
    %34 = vst.msk [vmem:[#allocation5] sm:$0x3] %vm33, %v32
    // Predicated region
    $region14: #{tpu_custom_call.1} parent=1 // pred_check
      _
    $region15: #{tpu_custom_call.1} parent=1 // pred_check_branch
      %36 = sbr.rel (0) target = $region17
    $region16: #{tpu_custom_call.1} parent=1 // pred_region
      %s38 = ssub.s32 32, 32
      %39 = vsyncadd [#allocation4], %s38
      %s41 = sshll.u32 [#allocation5], 4
      %s42 = int_to_ptr.vmem [resolvable:$true] %s41
      %44 = dma.vmem_to_hbm [thread:$0]  %s42, 32, %s2, [#allocation4]
    $region17: #{tpu_custom_call.1} parent=1 // pred_fallthru
      _
    // Predicated region
    $region18: #{tpu_custom_call.1} parent=1 // pred_check
      _
    $region19: #{tpu_custom_call.1} parent=1 // pred_check_branch
      %46 = sbr.rel (0) target = $region21
    $region20: #{tpu_custom_call.1} parent=1 // pred_region
      %47 = dma.done [#allocation4], 32
    $region21: #{tpu_custom_call.1} parent=1 // pred_fallthru
      _
    %48 = vsyncpa [#allocation3], 1
    %49 = vsyncpa [#allocation4], 1

</llo_original>
